<compile_context>
chip_gen: v7x
topology: tpu7x:2x2x1
jax: 0.10.0
libtpu: 0.0.40
codegen_flags: <defaults>
</compile_context>

<pallas_src>
import math

import jax
import jax.numpy as jnp
from jax.experimental import pallas as pl
from jax.experimental.pallas import tpu as pltpu


_LANE = 128
_TARGET_BLOCK_BYTES = 4 * 1024 * 1024   # ~4 MiB blocks: amortize ~0.35 us/step overhead
_MIN_PALLAS_ELEMS = 8 * _LANE           # below this, XLA fallback beats a kernel launch
_VMEM_LIMIT_BYTES = 32 << 20            # 2 in + 2 out bufs x 4 MiB = 16 MiB << 32 MiB
                                        # (safe on v5e/v6e 128 MiB and v7x 64 MiB VMEM)


# ----------------------------------------------------------------------------
# Kernel: out[b] = keep ? x[b] : 0        (keep-mask is int32 0/1 in SMEM)
# ----------------------------------------------------------------------------
def _mask_scale_kernel(mask_ref, x_ref, o_ref):
    m = mask_ref[pl.program_id(0)]                    # scalar int32 from SMEM
    # Native-dtype select: no f32 round-trip (exact for 0/1), and safe even
    # though dropped samples see a stale / de-duplicated input tile.
    o_ref[...] = jnp.where(m != 0, x_ref[...], jnp.zeros_like(x_ref[...]))


def _apply_keep_mask_pallas(x, keep_mask_i32):
    orig_shape = x.shape
    batch = orig_shape[0]
    numel = math.prod(orig_shape[1:])
    rows = numel // _LANE
    x3 = x.reshape(batch, rows, _LANE)                # free contiguous reshape

    itemsize = jnp.dtype(x.dtype).itemsize
    sublane_pack = max(8, 32 // itemsize)             # 8 f32 / 16 bf16 / 32 int8
    budget_rows = max(_TARGET_BLOCK_BYTES // (_LANE * itemsize), sublane_pack)
    if rows <= budget_rows:
        tile_rows = rows                              # full extent: always legal
    else:
        tile_rows = (budget_rows // sublane_pack) * sublane_pack
    n_row_tiles = pl.cdiv(rows, tile_rows)

    # Data-dependent x index_map: for dropped samples (mask[b] == 0) every row
    # tile maps to block (b, 0, 0); Pallas skips the DMA when the block index
    # is unchanged from the previous grid step, so a dropped sample fetches a
    # single tile instead of n_row_tiles tiles (~25% less HBM traffic at p=0.5).
    x_spec = pl.BlockSpec((1, tile_rows, _LANE),
                          lambda b, r, mask: (b, r * mask[b], 0))
    o_spec = pl.BlockSpec((1, tile_rows, _LANE),
                          lambda b, r, mask: (b, r, 0))

    out = pl.pallas_call(
        _mask_scale_kernel,
        out_shape=jax.ShapeDtypeStruct((batch, rows, _LANE), x.dtype),
        grid_spec=pltpu.PrefetchScalarGridSpec(
            num_scalar_prefetch=1,
            grid=(batch, n_row_tiles),
            in_specs=[x_spec],
            out_specs=o_spec,
        ),
        compiler_params=pltpu.CompilerParams(
            dimension_semantics=("parallel", "parallel"),
            vmem_limit_bytes=_VMEM_LIMIT_BYTES),
        cost_estimate=pl.CostEstimate(
            flops=batch * numel,
            transcendentals=0,
            bytes_accessed=2 * batch * numel * itemsize),
    )(keep_mask_i32, x3)

    return out.reshape(orig_shape)


def _apply_keep_mask(x, keep_mask_i32):
    """out[b] = x[b] * keep_mask[b]; Pallas for lane-dense tensors, XLA otherwise."""
    numel = math.prod(x.shape[1:]) if x.ndim > 1 else 1
    if x.ndim < 2 or numel % _LANE != 0 or numel < _MIN_PALLAS_ELEMS:
        # Lane-sparse or tiny per-sample payload: masked partial stores and the
        # pallas_call launch would dominate -> plain XLA multiply.
        bshape = (x.shape[0],) + (1,) * (x.ndim - 1)
        return x * keep_mask_i32.astype(x.dtype).reshape(bshape)
    return _apply_keep_mask_pallas(x, keep_mask_i32)


# ----------------------------------------------------------------------------
# Per-sample 0/1 keep-mask (tiny O(B) work — plain XLA, no kernel launch)
# ----------------------------------------------------------------------------
def droppath_keep_mask(key, batch, p, zero=None, keep=None):
    k_n, k_perm = jax.random.split(key)

    # n = (torch.rand(b) < p).sum()
    n = jnp.sum(jax.random.uniform(k_n, (batch,)) < p)

    # candidate mask: everything except `keep` / `zero`
    cand = jnp.ones((batch,), dtype=bool)
    if keep is not None:
        cand = cand & jnp.logical_not(keep)
    if zero is not None:
        cand = cand & jnp.logical_not(zero)

    # uniform random ranking of candidates == randperm; drop the first n
    r = jnp.where(cand, jax.random.uniform(k_perm, (batch,)), jnp.inf)
    rank = jnp.argsort(jnp.argsort(r))
    dropped = cand & (rank < n)
    if zero is not None:
        dropped = dropped | zero                 # forced-zero samples always drop

    return jnp.where(dropped, 0, 1).astype(jnp.int32)   # 1 = keep, 0 = drop


# ----------------------------------------------------------------------------
# Functional forward + module-like wrapper
# ----------------------------------------------------------------------------
def drop_path(args, p, key, training=True, zero=None, keep=None):
    if not isinstance(args, (tuple, list)):
        args = (args,)
    if not training:
        return args[0] if len(args) == 1 else tuple(args)
    batch = args[0].shape[0]
    mask = droppath_keep_mask(key, batch, p, zero=zero, keep=keep)
    outs = tuple(_apply_keep_mask(u, mask) for u in args)
    return outs[0] if len(outs) == 1 else outs


class DropPath:
    """DropPath without rescaling; supports optional all-zero / all-keep masks."""

    def __init__(self, p):
        self.p = p
        self.training = True

    def train(self):
        self.training = True
        return self

    def eval(self):
        self.training = False
        return self

    def __call__(self, *args, key=None, zero=None, keep=None):
        if not self.training:
            return args[0] if len(args) == 1 else args
        return drop_path(args, self.p, key, training=True, zero=zero, keep=keep)


# ----------------------------------------------------------------------------
if __name__ == "__main__":
    B, C, H, W = 2, 4, 16, 16
    root = jax.random.PRNGKey(0)
    k_x, k_x2, k_drop, k_drop2 = jax.random.split(root, 4)

    x = jax.random.normal(k_x, (B, C, H, W), jnp.float32)   # lane-dense arg (Pallas path)
    x2 = jax.random.normal(k_x2, (B, 8), jnp.float32)       # tiny arg (XLA fallback path)
    p = 0.5

    module = DropPath(p)

    # --- eval mode: identity -------------------------------------------------
    module.eval()
    y_eval = module(x, key=k_drop)
    assert y_eval.shape == x.shape and jnp.array_equal(y_eval, x)

    # --- train mode, jitted single-tensor path --------------------------------
    module.train()

    @jax.jit
    def train_forward(xs, key):
        return drop_path(xs, p, key)

    y = jax.block_until_ready(train_forward(x, k_drop))
    mask = droppath_keep_mask(k_drop, B, p)
    ref = x * mask.astype(x.dtype)[:, None, None, None]
    assert y.shape == x.shape
    assert jnp.all(jnp.isfinite(y))
    assert jnp.all((mask == 0) | (mask == 1))
    assert jnp.array_equal(y, ref), float(jnp.max(jnp.abs(y - ref)))

    # --- train mode, multi-arg + zero/keep masks -------------------------------
    zero = jnp.array([True, False])
    keep = jnp.array([False, True])
    o1, o2 = module(x, x2, key=k_drop2, zero=zero, keep=keep)
    o1, o2 = jax.block_until_ready((o1, o2))
    mask2 = droppath_keep_mask(k_drop2, B, p, zero=zero, keep=keep)
    assert int(mask2[0]) == 0                 # forced zero
    assert int(mask2[1]) == 1                 # forced keep
    assert jnp.array_equal(o1, x * mask2.astype(x.dtype)[:, None, None, None])
    assert jnp.array_equal(o2, x2 * mask2.astype(x2.dtype)[:, None])

    print("KERNEL_OK")
</pallas_src>

<mosaic_0001>
module attributes {stable_mosaic.version = 11 : i64} {
  func.func @_mask_scale_kernel(%arg0: i32, %arg1: i32, %arg2: memref<2xi32, #tpu.memory_space<smem>>, %arg3: memref<1x8x128xf32, #tpu.memory_space<vmem>>, %arg4: memref<1x8x128xf32, #tpu.memory_space<vmem>>) attributes {dimension_semantics = [#tpu.dimension_semantics<parallel>, #tpu.dimension_semantics<parallel>], iteration_bounds = array<i64: 2, 1>, scalar_prefetch = 1 : i64, scratch_operands = 0 : i64, tpu.core_type = #tpu.core_type<tc>, window_params = [{transform_indices = @transform_0, window_bounds = array<i64: 1, 8, 128>}, {transform_indices = @transform_1, window_bounds = array<i64: 1, 8, 128>}]} {
    %0 = arith.index_cast %arg0 : i32 to index
    %1 = memref.load %arg2[%0] : memref<2xi32, #tpu.memory_space<smem>>
    %c0_i32 = arith.constant 0 : i32
    %2 = arith.cmpi ne, %1, %c0_i32 : i32
    %c0 = arith.constant 0 : index
    %c0_0 = arith.constant 0 : index
    %c0_1 = arith.constant 0 : index
    %3 = vector.load %arg3[%c0, %c0_0, %c0_1] : memref<1x8x128xf32, #tpu.memory_space<vmem>>, vector<1x8x128xf32>
    %cst = arith.constant 0.000000e+00 : f32
    %4 = vector.broadcast %cst : f32 to vector<1x8x128xf32>
    %5 = arith.select %2, %3, %4 : vector<1x8x128xf32>
    %c0_2 = arith.constant 0 : index
    %c0_3 = arith.constant 0 : index
    %c0_4 = arith.constant 0 : index
    %6 = vector.load %arg4[%c0_2, %c0_3, %c0_4] : memref<1x8x128xf32, #tpu.memory_space<vmem>>, vector<1x8x128xf32>
    tpu.vector_store %arg4[%c0_2, %c0_3, %c0_4], %5 {strides = array<i32>} : memref<1x8x128xf32, #tpu.memory_space<vmem>>, vector<1x8x128xf32>,
    return
  }
  func.func @transform_0(%arg0: i32, %arg1: i32, %arg2: memref<2xi32, #tpu.memory_space<smem>>) -> (i32, i32, i32) {
    %0 = arith.index_cast %arg0 : i32 to index
    %1 = memref.load %arg2[%0] : memref<2xi32, #tpu.memory_space<smem>>
    %2 = arith.muli %arg1, %1 : i32
    %c0_i32 = arith.constant 0 : i32
    %c0_i32_0 = arith.constant 0 : i32
    return %arg0, %2, %c0_i32 : i32, i32, i32
  }
  func.func @transform_1(%arg0: i32, %arg1: i32, %arg2: memref<2xi32, #tpu.memory_space<smem>>) -> (i32, i32, i32) {
    %c0_i32 = arith.constant 0 : i32
    %c0_i32_0 = arith.constant 0 : i32
    return %arg0, %arg1, %c0_i32 : i32, i32, i32
  }
}

</mosaic_0001>

<llo_original>
// kernel: train_forward.1
$region0: #{train_forward.1}
  #allocation0 [shape = 'u32[]', space=smem, size = 0x4, offset = 0x4, fixed_abs, tag = 'smem constant byte address 0x4 - core index']
  #allocation1 [shape = 'u32[144,128]{1,0:T(1,128)}', space=vmem, size = 0x12000, scoped, tag = 'internal scratch']
  #allocation2 [shape = 's32[1]{0}', space=sflag, size = 0x4, scoped, tag = 'scoped memory for train_forward.1']
  #allocation3 [shape = 'u8[512]{0}', space=smem, size = 0x200, scoped, tag = 'prefetched SMEM operand 0']
  %s0 = inlined_call_operand.vmem [shape: s32[2], index: 0, kind: input, shape index: {}]
  %s1 = inlined_call_operand.vmem [shape: f32[2,8,128], index: 1, kind: input, shape index: {}]
  %s2 = inlined_call_operand.vmem [shape: f32[2,8,128], index: 2, kind: output, shape index: {}]
  %s3 = sld [smem:[#allocation0]]
  $region37: #{train_forward.1} parent=0
    _
  %s5 = ssub.s32 1, %s3
  %s6 = scalar_select 0, %s5, %s3
  %s7 = sshll.u32 %s0, 4
  %s8 = int_to_ptr.vmem [resolvable:$true] %s7
  %10 = dma.vmem_to_smem %s8, 16, [#allocation3], [#allocation2]
  %11 = dma.done [#allocation2], 16
  %12 = sfence
  loop: start=0, step=1, limit=4
  $region2: #{train_forward.1} parent=0 // loop_pre_header
    _
  $region3: #{train_forward.1} parent=0 // loop_header
    %s14 = sphi 0, %s18
    %p15 = scmp.ge.s32.totalorder %s14, 4
    %s21 = sphi 0, %s33
    %s22 = sphi 0, %s29
    %s23 = sphi 0, %s21
    %s24 = sphi 0, %s22
    %s25 = sphi 0, %s23
    %s26 = sphi 0, %s24
    %s42 = sphi 0, %s44
    %s45 = sphi 0, %s42
    %s46 = sphi 0, %s45
    %s62 = sphi 0, %s46
    %s70 = sphi 0, %s72
    %s73 = sphi 0, %s70
    %s74 = sphi 0, %s73
    %s90 = sphi 0, %s74
  $region4: #{train_forward.1} parent=0 // loop_header_branch
    %17 = sbr.rel (%p15) target = $region8
  $region5: #{train_forward.1} parent=0 // loop_body
    %s19 = ssub.s32 %s14, 1
    %s20 = ssub.s32 %s14, 2
    %s27 = sadd.s32 1, %s22
    %p28 = scmp.ge.s32.totalorder %s27, 1
    %s29 = scalar_select %p28, 0, %s27
    %s30 = sadd.s32 1, %s21
    %s31 = scalar_select %p28, %s30, %s21
    %p32 = scmp.ge.s32.totalorder %s31, 2
    %s33 = scalar_select %p32, 0, %s31
    %s34 = sld [smem:[#allocation3 + %s21]]
    %s35 = smul.u32 %s22, %s34
    %s36 = sld [smem:[#allocation3 + %s33]]
    %s37 = smul.u32 %s29, %s36
    %s38 = ssub.s32 %s21, %s33
    %s39 = ssub.s32 %s35, %s37
    %s40 = sor.u32 %s38, %s39
    %p41 = scmp.eq.s32.totalorder %s40, 0
    %s43 = sadd.s32 %s42, 1
    %s44 = scalar_select %p41, %s42, %s43
    %p47 = pneg %p41
    %p48 = scmp.eq.s32.totalorder %s14, 1
    %p49 = por %p47, %p48
    %p50 = scmp.ne.s32.totalorder %s42, %s45
    %p51 = scmp.eq.s32.totalorder %s14, 0
    %p52 = por %p50, %p51
    %p53 = scmp.ne.s32.totalorder %s42, %s45
    %p54 = scmp.eq.s32.totalorder %s19, 1
    %p55 = por %p53, %p54
    %p56 = scmp.ne.s32.totalorder %s45, %s46
    %p57 = scmp.eq.s32.totalorder %s19, 0
    %p58 = por %p56, %p57
    %p59 = scmp.ne.s32.totalorder %s45, %s46
    %p60 = scmp.eq.s32.totalorder %s20, 1
    %p61 = por %p59, %p60
    %p63 = scmp.ne.s32.totalorder %s46, %s62
    %p64 = scmp.eq.s32.totalorder %s20, 0
    %p65 = por %p63, %p64
    %s66 = ssub.s32 %s21, %s33
    %s67 = ssub.s32 %s22, %s29
    %s68 = sor.u32 %s66, %s67
    %p69 = scmp.eq.s32.totalorder %s68, 0
    %s71 = sadd.s32 %s70, 1
    %s72 = scalar_select %p69, %s70, %s71
    %p75 = pneg %p69
    %p76 = scmp.eq.s32.totalorder %s14, 1
    %p77 = por %p75, %p76
    %p78 = scmp.ne.s32.totalorder %s70, %s73
    %p79 = scmp.eq.s32.totalorder %s14, 0
    %p80 = por %p78, %p79
    %p81 = scmp.ne.s32.totalorder %s70, %s73
    %p82 = scmp.eq.s32.totalorder %s19, 1
    %p83 = por %p81, %p82
    %p84 = scmp.ne.s32.totalorder %s73, %s74
    %p85 = scmp.eq.s32.totalorder %s19, 0
    %p86 = por %p84, %p85
    %p87 = scmp.ne.s32.totalorder %s73, %s74
    %p88 = scmp.eq.s32.totalorder %s20, 1
    %p89 = por %p87, %p88
    %p91 = scmp.ne.s32.totalorder %s74, %s90
    %p92 = scmp.eq.s32.totalorder %s20, 0
    %p93 = por %p91, %p92
    %p94 = scmp.le.s32.totalorder 1, %s14
    %p95 = scmp.lt.s32.totalorder %s14, 3
    %p96 = pnand %p94, %p95
    %p97 = pneg %p96
    // Predicated region
    $region9: #{train_forward.1} parent=5 // pred_check
      _
    $region10: #{train_forward.1} parent=5 // pred_check_branch
      %99 = sbr.rel (%p96) target = $region12
    $region11: #{train_forward.1} parent=5 // pred_region
      %s100 = ssub.s32 %s14, 1
    $region12: #{train_forward.1} parent=5 // pred_fallthru
      _
    %p101 = scmp.lt.s32.totalorder %s14, 2
    // Predicated region
    $region13: #{train_forward.1} parent=5 // pred_check
      %p102 = pneg %p101
    $region14: #{train_forward.1} parent=5 // pred_check_branch
      %104 = sbr.rel (%p102) target = $region16
    $region15: #{train_forward.1} parent=5 // pred_region
      // Predicated region
      $region17: #{train_forward.1} parent=15 // pred_check
        %p105 = pneg %p52
      $region18: #{train_forward.1} parent=15 // pred_check_branch
        %107 = sbr.rel (%p105) target = $region20
      $region19: #{train_forward.1} parent=15 // pred_region
        %s108 = sld [smem:[#allocation3 + %s21]]
        %s109 = smul.u32 %s22, %s108
        %p110 = scmp.lt.s32.totalorder %s21, 1
        %s111 = scalar_select %p110, %s21, 1
        %p112 = scmp.lt.s32.totalorder %s109, 0
        %s113 = scalar_select %p112, %s109, 0
        %s114 = sadd.s32 %s113, %s111
        %s115 = smul.addr %s114, 8
        %s116 = scalar_lea.vmem %s1, %s115
        %s117 = sld [smem:[#allocation3 + %s21]]
        %s118 = smul.u32 %s22, %s117
      $region20: #{train_forward.1} parent=15 // pred_fallthru
        _
    $region16: #{train_forward.1} parent=5 // pred_fallthru
      _
    %p119 = scmp.le.s32.totalorder 1, %s14
    %p120 = scmp.lt.s32.totalorder %s14, 3
    %p121 = pnand %p119, %p120
    %p122 = pneg %p121
    // Predicated region
    $region21: #{train_forward.1} parent=5 // pred_check
      _
    $region22: #{train_forward.1} parent=5 // pred_check_branch
      %124 = sbr.rel (%p121) target = $region24
    $region23: #{train_forward.1} parent=5 // pred_region
      %s125 = ssub.s32 %s14, 1
      %s126 = sld [smem:[#allocation3 + %s23]]
      %s127 = smul.u32 %s24, %s126
      %p128 = scmp.lt.s32.totalorder %s23, 1
      %s129 = scalar_select %p128, %s23, 1
      %p130 = scmp.lt.s32.totalorder %s127, 0
      %s131 = scalar_select %p130, %s127, 0
      %s132 = sadd.s32 %s131, %s129
      %s133 = smul.addr %s132, 8
      %s134 = scalar_lea.vmem %s1, %s133
      %p135 = pneg %p58
      %p136 = pneg %p55
      %p137 = pneg %p86
      %p138 = pneg %p83
      %p139 = scmp.lt.s32.totalorder %s23, 1
      %s140 = scalar_select %p139, %s23, 1
      %p141 = scmp.lt.s32.totalorder %s24, 0
      %s142 = scalar_select %p141, %s24, 0
      %s143 = sadd.s32 %s142, %s140
      %s144 = smul.addr %s143, 8
      %s145 = scalar_lea.vmem %s2, %s144
      %s146 = sld [smem:[#allocation3 + %s23]]
      %s147 = smul.u32 %s24, %s146
      %p148 = scmp.lt.s32.totalorder %s23, 1
      %s149 = scalar_select %p148, %s23, 1
      %p150 = scmp.lt.s32.totalorder %s147, 0
      %s151 = scalar_select %p150, %s147, 0
      %s152 = sadd.s32 %s151, %s149
      %s153 = smul.addr %s152, 8
      %s154 = scalar_lea.vmem %s1, %s153
      %s155 = sld [smem:[#allocation3 + %s23]]
      %s156 = smul.u32 %s24, %s155
      %p157 = scmp.lt.s32.totalorder %s23, 1
      %s158 = scalar_select %p157, %s23, 1
      %p159 = scmp.lt.s32.totalorder %s24, 0
      %s160 = scalar_select %p159, %s24, 0
      %s161 = sadd.s32 %s160, %s158
      %s162 = smul.addr %s161, 8
      %s163 = scalar_lea.vmem %s2, %s162
      %s164 = sld [smem:[#allocation3 + %s23]]
      %p165 = scmp.ne.s32.totalorder %s164, 0
      %v166 = vld [vmem:[%s154] sm:$0xff]
      %s167 = scalar_select %p165, 1, 0
      %v168 = vstv %s167
      %vm169 = vcmp.eq.s32.totalorder %v168, 1
      %v170 = vsel %vm169, %v166, 0.0
      %171 = vst [vmem:[%s163] sm:$0xff] %v170
      %p172 = scmp.lt.s32.totalorder %s23, 1
      %s173 = scalar_select %p172, %s23, 1
      %p174 = scmp.lt.s32.totalorder %s24, 0
      %s175 = scalar_select %p174, %s24, 0
      %s176 = sadd.s32 %s175, %s173
      %s177 = smul.addr %s176, 8
      %s178 = scalar_lea.vmem %s2, %s177
      // Predicated region
      $region25: #{train_forward.1} parent=23 // pred_check
        %p179 = pneg %p83
      $region26: #{train_forward.1} parent=23 // pred_check_branch
        %181 = sbr.rel (%p179) target = $region28
      $region27: #{train_forward.1} parent=23 // pred_region
        _
      $region28: #{train_forward.1} parent=23 // pred_fallthru
        _
    $region24: #{train_forward.1} parent=5 // pred_fallthru
      _
    %p182 = scmp.le.s32.totalorder 2, %s14
    // Predicated region
    $region29: #{train_forward.1} parent=5 // pred_check
      %p183 = pneg %p182
    $region30: #{train_forward.1} parent=5 // pred_check_branch
      %185 = sbr.rel (%p183) target = $region32
    $region31: #{train_forward.1} parent=5 // pred_region
      %s186 = ssub.s32 %s14, 2
      // Predicated region
      $region33: #{train_forward.1} parent=31 // pred_check
        %p187 = pneg %p89
      $region34: #{train_forward.1} parent=31 // pred_check_branch
        %189 = sbr.rel (%p187) target = $region36
      $region35: #{train_forward.1} parent=31 // pred_region
        %p190 = scmp.lt.s32.totalorder %s25, 1
        %s191 = scalar_select %p190, %s25, 1
        %p192 = scmp.lt.s32.totalorder %s26, 0
        %s193 = scalar_select %p192, %s26, 0
        %s194 = sadd.s32 %s193, %s191
        %s195 = smul.addr %s194, 8
        %s196 = scalar_lea.vmem %s2, %s195
      $region36: #{train_forward.1} parent=31 // pred_fallthru
        _
    $region32: #{train_forward.1} parent=5 // pred_fallthru
      _
  $region6: #{train_forward.1} parent=0 // loop_footer
    %s18 = sadd.s32 1, %s14
  $region7: #{train_forward.1} parent=0 // loop_footer_branch
    %13 = sbr.rel target = $region3
  $region8: #{train_forward.1} parent=0 // loop_exit
    _

</llo_original>
